<compile_context>
chip_gen: v6e
topology: v6e:2x2x1
jax: 0.10.0
libtpu: 0.0.40
codegen_flags: <defaults>
</compile_context>

<pallas_src>
import functools

import jax
import jax.numpy as jnp
from jax import lax
from jax.experimental import pallas as pl
from jax.experimental.pallas import tpu as pltpu


def _round_up(x, m):
    return (x + m - 1) // m * m


def _rnn_chunk_kernel(gamma, chunk, total_steps,
                      h0_ref, drive_ref, wrec_ref,
                      hseq_ref, hlast_ref,
                      h_scr):
    """One grid step == `chunk` RNN timesteps. Hidden carried in VMEM scratch.

    drive_ref : (chunk, Bp, Hp)  precomputed  x@W_in^T + bias + noise
    wrec_ref  : (Hp, Hp)         W_rec^T (resident)
    hseq_ref  : (chunk, Bp, Hp)  pre-update hidden at each step (for readout)
    hlast_ref : (Bp, Hp)         final hidden (written on last chunk)
    """
    c = pl.program_id(0)

    @pl.when(c == 0)
    def _():
        h_scr[...] = h0_ref[...]

    base = c * chunk

    def step(i, carry):
        h = h_scr[...]                                   # (Bp, Hp) f32
        hseq_ref[i] = h                                  # readout uses pre-update h
        pre = jnp.dot(jnp.tanh(h), wrec_ref[...],
                      preferred_element_type=jnp.float32) + drive_ref[i]
        hnew = (1.0 - gamma) * h + gamma * pre
        if total_steps is None:                          # T is a multiple of chunk
            h_scr[...] = hnew
        else:                                            # mask padded trailing steps
            h_scr[...] = jnp.where(base + i < total_steps, hnew, h)
        return carry

    lax.fori_loop(0, chunk, step, 0, unroll=True)

    @pl.when(c == pl.num_programs(0) - 1)
    def _():
        hlast_ref[...] = h_scr[...]


def full_rank_rnn_scan(inputs_seq, hidden0, params, noise_seq, *, gamma=0.2,
                       chunk=None):
    """Run T steps of FullRankRNN.forward.

    inputs_seq: (T, B, I), hidden0: (B, H), noise_seq: (T, B, H)
    returns (outputs (T, B, O), final hidden (B, H)).
    """
    T, B, I = inputs_seq.shape
    _, H = hidden0.shape
    W_rec, W_in, bias, W_out, b_out = params      # torch Linear layouts
    O = W_out.shape[0]
    f32 = jnp.float32

    # Hardware-aligned padded shapes: sublane multiple of 8, lane multiple of 128.
    Bp = _round_up(max(B, 8), 8)
    Hp = _round_up(H, 128)

    if chunk is None:
        chunk = min(T, 32)                 # (chunk, Bp, Hp) streamed block stays small
    n_chunks = pl.cdiv(T, chunk)
    Tp = n_chunks * chunk

    # --- hoisted input projection (one well-shaped batched matmul, XLA) ------
    drive = (inputs_seq.reshape(T * B, I).astype(f32)
             @ W_in.T.astype(f32)).reshape(T, B, H)
    drive = drive + bias[None, None, :].astype(f32) + noise_seq.astype(f32)

    # --- padded operands (zero padding keeps padded lanes/rows exactly 0) ----
    drive_p = jnp.zeros((Tp, Bp, Hp), f32).at[:T, :B, :H].set(drive)
    h0_p = jnp.zeros((Bp, Hp), f32).at[:B, :H].set(hidden0.astype(f32))
    wrec_t = jnp.zeros((Hp, Hp), f32).at[:H, :H].set(W_rec.T.astype(f32))

    kernel = functools.partial(_rnn_chunk_kernel, float(gamma), int(chunk),
                               None if Tp == T else T)

    hseq_p, hlast_p = pl.pallas_call(
        kernel,
        out_shape=(
            jax.ShapeDtypeStruct((Tp, Bp, Hp), f32),     # pre-update hiddens
            jax.ShapeDtypeStruct((Bp, Hp), f32),         # final hidden
        ),
        grid=(n_chunks,),
        in_specs=[
            pl.BlockSpec((Bp, Hp), lambda c: (0, 0)),            # h0 (resident)
            pl.BlockSpec((chunk, Bp, Hp), lambda c: (c, 0, 0)),  # drive chunk (streamed)
            pl.BlockSpec((Hp, Hp), lambda c: (0, 0)),            # W_rec^T (resident)
        ],
        out_specs=(
            pl.BlockSpec((chunk, Bp, Hp), lambda c: (c, 0, 0)),  # hidden-seq chunk
            pl.BlockSpec((Bp, Hp), lambda c: (0, 0)),            # final hidden
        ),
        scratch_shapes=[pltpu.VMEM((Bp, Hp), jnp.float32)],      # hidden carry
        compiler_params=pltpu.CompilerParams(
            dimension_semantics=("arbitrary",)),                 # sequential carry
    )(h0_p, drive_p, wrec_t)

    # --- hoisted readout (one well-shaped batched matmul, XLA) ---------------
    hseq = hseq_p[:T, :B, :H]
    outputs = (hseq.reshape(T * B, H) @ W_out.T.astype(f32)
               + b_out.astype(f32)).reshape(T, B, O)
    return outputs, hlast_p[:B, :H]


def full_rank_rnn_forward(inputs, hidden, params, noise, *, gamma=0.2):
    """Single-step API matching FullRankRNN.forward: returns (output, new_hidden)."""
    out_seq, hnew = full_rank_rnn_scan(inputs[None], hidden, params, noise[None],
                                       gamma=gamma)
    return out_seq[0], hnew


def init_params(key, input_size, latent_size, output_size):
    """Deterministic parameter init matching the module's shapes (torch layouts)."""
    k1, k2, k3, k4 = jax.random.split(key, 4)
    b_rec = 1.0 / jnp.sqrt(latent_size)
    b_in = 1.0 / jnp.sqrt(input_size)
    b_out_lim = 1.0 / jnp.sqrt(latent_size)
    W_rec = jax.random.uniform(k1, (latent_size, latent_size), jnp.float32, -b_rec, b_rec)
    W_in = jax.random.uniform(k2, (latent_size, input_size), jnp.float32, -b_in, b_in)
    bias = jnp.zeros((latent_size,), jnp.float32)
    W_out = jax.random.uniform(k3, (output_size, latent_size), jnp.float32, -b_out_lim, b_out_lim)
    b_out = jax.random.uniform(k4, (output_size,), jnp.float32, -b_out_lim, b_out_lim)
    return W_rec, W_in, bias, W_out, b_out


def reference_forward(inputs, hidden, params, noise, *, gamma=0.2):
    W_rec, W_in, bias, W_out, b_out = params
    output = hidden @ W_out.T + b_out
    pre = jnp.tanh(hidden) @ W_rec.T + inputs @ W_in.T + bias + noise
    hnew = (1.0 - gamma) * hidden + gamma * pre
    return output, hnew


if __name__ == "__main__":
    # Small shapes consistent with the module's forward.
    B, I, H, O, T = 2, 4, 32, 3, 8
    noise_level = 0.05
    gamma = 0.2

    key = jax.random.PRNGKey(0)
    k_par, k_x, k_h, k_n = jax.random.split(key, 4)

    params = init_params(k_par, I, H, O)
    inputs_seq = jax.random.normal(k_x, (T, B, I), jnp.float32)
    hidden0 = jax.random.normal(k_h, (B, H), jnp.float32)
    # noise = randn_like(hidden) * noise_level, one draw per step (host-side, deterministic)
    noise_seq = jax.random.normal(k_n, (T, B, H), jnp.float32) * noise_level

    # --- multi-step kernel vs. step-by-step reference ---
    outs, h_last = full_rank_rnn_scan(inputs_seq, hidden0, params, noise_seq, gamma=gamma)
    outs = jax.block_until_ready(outs)
    h_last = jax.block_until_ready(h_last)

    h_ref = hidden0
    outs_ref = []
    for t in range(T):
        o_ref, h_ref = reference_forward(inputs_seq[t], h_ref, params, noise_seq[t], gamma=gamma)
        outs_ref.append(o_ref)
    outs_ref = jnp.stack(outs_ref)

    assert jnp.allclose(outs, outs_ref, atol=1e-5, rtol=1e-5)
    assert jnp.allclose(h_last, h_ref, atol=1e-5, rtol=1e-5)

    # --- non-divisible chunking path (Tp > T masking) ---
    outs2, h_last2 = full_rank_rnn_scan(inputs_seq, hidden0, params, noise_seq,
                                        gamma=gamma, chunk=3)
    outs2 = jax.block_until_ready(outs2)
    assert jnp.allclose(outs2, outs_ref, atol=1e-5, rtol=1e-5)
    assert jnp.allclose(h_last2, h_ref, atol=1e-5, rtol=1e-5)

    # --- single-step API (matches the module's forward signature) ---
    out1, h1 = full_rank_rnn_forward(inputs_seq[0], hidden0, params, noise_seq[0], gamma=gamma)
    out1 = jax.block_until_ready(out1)
    h1 = jax.block_until_ready(h1)
    out1_ref, h1_ref = reference_forward(inputs_seq[0], hidden0, params, noise_seq[0], gamma=gamma)
    assert jnp.allclose(out1, out1_ref, atol=1e-5, rtol=1e-5)
    assert jnp.allclose(h1, h1_ref, atol=1e-5, rtol=1e-5)

    print("KERNEL_OK")
</pallas_src>

<mosaic_0001>
module attributes {stable_mosaic.version = 11 : i64} {
  func.func @_rnn_chunk_kernel(%arg0: i32, %arg1: memref<8x128xf32, #tpu.memory_space<vmem>>, %arg2: memref<8x8x128xf32, #tpu.memory_space<vmem>>, %arg3: memref<128x128xf32, #tpu.memory_space<vmem>>, %arg4: memref<8x8x128xf32, #tpu.memory_space<vmem>>, %arg5: memref<8x128xf32, #tpu.memory_space<vmem>>, %arg6: memref<8x128xf32, #tpu.memory_space<vmem>>) attributes {dimension_semantics = [#tpu.dimension_semantics<arbitrary>], iteration_bounds = array<i64: 1>, scalar_prefetch = 0 : i64, scratch_operands = 1 : i64, tpu.core_type = #tpu.core_type<tc>, window_params = [{pipeline_mode = #tpu.pipeline_mode<synchronous>, transform_indices = @transform_0, window_bounds = array<i64: 8, 128>}, {transform_indices = @transform_1, window_bounds = array<i64: 8, 8, 128>}, {pipeline_mode = #tpu.pipeline_mode<synchronous>, transform_indices = @transform_2, window_bounds = array<i64: 128, 128>}, {transform_indices = @transform_3, window_bounds = array<i64: 8, 8, 128>}, {pipeline_mode = #tpu.pipeline_mode<synchronous>, transform_indices = @transform_4, window_bounds = array<i64: 8, 128>}]} {
    %c0_i32 = arith.constant 0 : i32
    %0 = arith.cmpi eq, %arg0, %c0_i32 : i32
    %1 = arith.extui %0 : i1 to i32
    %c0_i32_0 = arith.constant 0 : i32
    %2 = arith.cmpi ne, %1, %c0_i32_0 : i32
    scf.if %2 {
      %c0_106 = arith.constant 0 : index
      %c0_107 = arith.constant 0 : index
      %150 = vector.load %arg1[%c0_106, %c0_107] : memref<8x128xf32, #tpu.memory_space<vmem>>, vector<8x128xf32>
      %c0_108 = arith.constant 0 : index
      %c0_109 = arith.constant 0 : index
      %151 = vector.load %arg6[%c0_108, %c0_109] : memref<8x128xf32, #tpu.memory_space<vmem>>, vector<8x128xf32>
      tpu.vector_store %arg6[%c0_108, %c0_109], %150 {strides = array<i32>} : memref<8x128xf32, #tpu.memory_space<vmem>>, vector<8x128xf32>,
    } else {
    }
    %c0_i32_1 = arith.constant 0 : i32
    %c0 = arith.constant 0 : index
    %c0_2 = arith.constant 0 : index
    %3 = vector.load %arg6[%c0, %c0_2] : memref<8x128xf32, #tpu.memory_space<vmem>>, vector<8x128xf32>
    %4 = arith.index_cast %c0_i32_1 : i32 to index
    %c0_3 = arith.constant 0 : index
    %c0_4 = arith.constant 0 : index
    %5 = vector.load %arg4[%4, %c0_3, %c0_4] : memref<8x8x128xf32, #tpu.memory_space<vmem>>, vector<1x8x128xf32>
    %6 = vector.shape_cast %5 : vector<1x8x128xf32> to vector<8x128xf32>
    %7 = vector.shape_cast %3 : vector<8x128xf32> to vector<1x8x128xf32>
    tpu.vector_store %arg4[%4, %c0_3, %c0_4], %7 {strides = array<i32>} : memref<8x8x128xf32, #tpu.memory_space<vmem>>, vector<1x8x128xf32>,
    %8 = math.tanh %3 : vector<8x128xf32>
    %c0_5 = arith.constant 0 : index
    %c0_6 = arith.constant 0 : index
    %9 = vector.load %arg3[%c0_5, %c0_6] : memref<128x128xf32, #tpu.memory_space<vmem>>, vector<128x128xf32>
    %cst = arith.constant dense<0.000000e+00> : vector<8x128xf32>
    %10 = tpu.matmul %8, %9, %cst {dimension_numbers = #tpu.dot_dimension_numbers<[1], [0], [0], [1], [0, 0, 1, 1], [], []>} : vector<8x128xf32>, vector<128x128xf32>, vector<8x128xf32> -> vector<8x128xf32>
    %11 = arith.index_cast %c0_i32_1 : i32 to index
    %c0_7 = arith.constant 0 : index
    %c0_8 = arith.constant 0 : index
    %12 = vector.load %arg2[%11, %c0_7, %c0_8] : memref<8x8x128xf32, #tpu.memory_space<vmem>>, vector<1x8x128xf32>
    %13 = vector.shape_cast %12 : vector<1x8x128xf32> to vector<8x128xf32>
    %14 = arith.addf %10, %13 : vector<8x128xf32>
    %cst_9 = arith.constant 8.000000e-01 : f32
    %15 = vector.broadcast %cst_9 : f32 to vector<8x128xf32>
    %16 = arith.mulf %15, %3 : vector<8x128xf32>
    %cst_10 = arith.constant 2.000000e-01 : f32
    %17 = vector.broadcast %cst_10 : f32 to vector<8x128xf32>
    %18 = arith.mulf %17, %14 : vector<8x128xf32>
    %19 = arith.addf %16, %18 : vector<8x128xf32>
    %c0_11 = arith.constant 0 : index
    %c0_12 = arith.constant 0 : index
    %20 = vector.load %arg6[%c0_11, %c0_12] : memref<8x128xf32, #tpu.memory_space<vmem>>, vector<8x128xf32>
    tpu.vector_store %arg6[%c0_11, %c0_12], %19 {strides = array<i32>} : memref<8x128xf32, #tpu.memory_space<vmem>>, vector<8x128xf32>,
    %c1_i32 = arith.constant 1 : i32
    %c0_13 = arith.constant 0 : index
    %c0_14 = arith.constant 0 : index
    %21 = vector.load %arg6[%c0_13, %c0_14] : memref<8x128xf32, #tpu.memory_space<vmem>>, vector<8x128xf32>
    %22 = arith.index_cast %c1_i32 : i32 to index
    %c0_15 = arith.constant 0 : index
    %c0_16 = arith.constant 0 : index
    %23 = vector.load %arg4[%22, %c0_15, %c0_16] : memref<8x8x128xf32, #tpu.memory_space<vmem>>, vector<1x8x128xf32>
    %24 = vector.shape_cast %23 : vector<1x8x128xf32> to vector<8x128xf32>
    %25 = vector.shape_cast %21 : vector<8x128xf32> to vector<1x8x128xf32>
    tpu.vector_store %arg4[%22, %c0_15, %c0_16], %25 {strides = array<i32>} : memref<8x8x128xf32, #tpu.memory_space<vmem>>, vector<1x8x128xf32>,
    %26 = math.tanh %21 : vector<8x128xf32>
    %c0_17 = arith.constant 0 : index
    %c0_18 = arith.constant 0 : index
    %27 = vector.load %arg3[%c0_17, %c0_18] : memref<128x128xf32, #tpu.memory_space<vmem>>, vector<128x128xf32>
    %cst_19 = arith.constant dense<0.000000e+00> : vector<8x128xf32>
    %28 = tpu.matmul %26, %27, %cst_19 {dimension_numbers = #tpu.dot_dimension_numbers<[1], [0], [0], [1], [0, 0, 1, 1], [], []>} : vector<8x128xf32>, vector<128x128xf32>, vector<8x128xf32> -> vector<8x128xf32>
    %29 = arith.index_cast %c1_i32 : i32 to index
    %c0_20 = arith.constant 0 : index
    %c0_21 = arith.constant 0 : index
    %30 = vector.load %arg2[%29, %c0_20, %c0_21] : memref<8x8x128xf32, #tpu.memory_space<vmem>>, vector<1x8x128xf32>
    %31 = vector.shape_cast %30 : vector<1x8x128xf32> to vector<8x128xf32>
    %32 = arith.addf %28, %31 : vector<8x128xf32>
    %cst_22 = arith.constant 8.000000e-01 : f32
    %33 = vector.broadcast %cst_22 : f32 to vector<8x128xf32>
    %34 = arith.mulf %33, %21 : vector<8x128xf32>
    %cst_23 = arith.constant 2.000000e-01 : f32
    %35 = vector.broadcast %cst_23 : f32 to vector<8x128xf32>
    %36 = arith.mulf %35, %32 : vector<8x128xf32>
    %37 = arith.addf %34, %36 : vector<8x128xf32>
    %c0_24 = arith.constant 0 : index
    %c0_25 = arith.constant 0 : index
    %38 = vector.load %arg6[%c0_24, %c0_25] : memref<8x128xf32, #tpu.memory_space<vmem>>, vector<8x128xf32>
    tpu.vector_store %arg6[%c0_24, %c0_25], %37 {strides = array<i32>} : memref<8x128xf32, #tpu.memory_space<vmem>>, vector<8x128xf32>,
    %c2_i32 = arith.constant 2 : i32
    %c0_26 = arith.constant 0 : index
    %c0_27 = arith.constant 0 : index
    %39 = vector.load %arg6[%c0_26, %c0_27] : memref<8x128xf32, #tpu.memory_space<vmem>>, vector<8x128xf32>
    %40 = arith.index_cast %c2_i32 : i32 to index
    %c0_28 = arith.constant 0 : index
    %c0_29 = arith.constant 0 : index
    %41 = vector.load %arg4[%40, %c0_28, %c0_29] : memref<8x8x128xf32, #tpu.memory_space<vmem>>, vector<1x8x128xf32>
    %42 = vector.shape_cast %41 : vector<1x8x128xf32> to vector<8x128xf32>
    %43 = vector.shape_cast %39 : vector<8x128xf32> to vector<1x8x128xf32>
    tpu.vector_store %arg4[%40, %c0_28, %c0_29], %43 {strides = array<i32>} : memref<8x8x128xf32, #tpu.memory_space<vmem>>, vector<1x8x128xf32>,
    %44 = math.tanh %39 : vector<8x128xf32>
    %c0_30 = arith.constant 0 : index
    %c0_31 = arith.constant 0 : index
    %45 = vector.load %arg3[%c0_30, %c0_31] : memref<128x128xf32, #tpu.memory_space<vmem>>, vector<128x128xf32>
    %cst_32 = arith.constant dense<0.000000e+00> : vector<8x128xf32>
    %46 = tpu.matmul %44, %45, %cst_32 {dimension_numbers = #tpu.dot_dimension_numbers<[1], [0], [0], [1], [0, 0, 1, 1], [], []>} : vector<8x128xf32>, vector<128x128xf32>, vector<8x128xf32> -> vector<8x128xf32>
    %47 = arith.index_cast %c2_i32 : i32 to index
    %c0_33 = arith.constant 0 : index
    %c0_34 = arith.constant 0 : index
    %48 = vector.load %arg2[%47, %c0_33, %c0_34] : memref<8x8x128xf32, #tpu.memory_space<vmem>>, vector<1x8x128xf32>
    %49 = vector.shape_cast %48 : vector<1x8x128xf32> to vector<8x128xf32>
    %50 = arith.addf %46, %49 : vector<8x128xf32>
    %cst_35 = arith.constant 8.000000e-01 : f32
    %51 = vector.broadcast %cst_35 : f32 to vector<8x128xf32>
    %52 = arith.mulf %51, %39 : vector<8x128xf32>
    %cst_36 = arith.constant 2.000000e-01 : f32
    %53 = vector.broadcast %cst_36 : f32 to vector<8x128xf32>
    %54 = arith.mulf %53, %50 : vector<8x128xf32>
    %55 = arith.addf %52, %54 : vector<8x128xf32>
    %c0_37 = arith.constant 0 : index
    %c0_38 = arith.constant 0 : index
    %56 = vector.load %arg6[%c0_37, %c0_38] : memref<8x128xf32, #tpu.memory_space<vmem>>, vector<8x128xf32>
    tpu.vector_store %arg6[%c0_37, %c0_38], %55 {strides = array<i32>} : memref<8x128xf32, #tpu.memory_space<vmem>>, vector<8x128xf32>,
    %c3_i32 = arith.constant 3 : i32
    %c0_39 = arith.constant 0 : index
    %c0_40 = arith.constant 0 : index
    %57 = vector.load %arg6[%c0_39, %c0_40] : memref<8x128xf32, #tpu.memory_space<vmem>>, vector<8x128xf32>
    %58 = arith.index_cast %c3_i32 : i32 to index
    %c0_41 = arith.constant 0 : index
    %c0_42 = arith.constant 0 : index
    %59 = vector.load %arg4[%58, %c0_41, %c0_42] : memref<8x8x128xf32, #tpu.memory_space<vmem>>, vector<1x8x128xf32>
    %60 = vector.shape_cast %59 : vector<1x8x128xf32> to vector<8x128xf32>
    %61 = vector.shape_cast %57 : vector<8x128xf32> to vector<1x8x128xf32>
    tpu.vector_store %arg4[%58, %c0_41, %c0_42], %61 {strides = array<i32>} : memref<8x8x128xf32, #tpu.memory_space<vmem>>, vector<1x8x128xf32>,
    %62 = math.tanh %57 : vector<8x128xf32>
    %c0_43 = arith.constant 0 : index
    %c0_44 = arith.constant 0 : index
    %63 = vector.load %arg3[%c0_43, %c0_44] : memref<128x128xf32, #tpu.memory_space<vmem>>, vector<128x128xf32>
    %cst_45 = arith.constant dense<0.000000e+00> : vector<8x128xf32>
    %64 = tpu.matmul %62, %63, %cst_45 {dimension_numbers = #tpu.dot_dimension_numbers<[1], [0], [0], [1], [0, 0, 1, 1], [], []>} : vector<8x128xf32>, vector<128x128xf32>, vector<8x128xf32> -> vector<8x128xf32>
    %65 = arith.index_cast %c3_i32 : i32 to index
    %c0_46 = arith.constant 0 : index
    %c0_47 = arith.constant 0 : index
    %66 = vector.load %arg2[%65, %c0_46, %c0_47] : memref<8x8x128xf32, #tpu.memory_space<vmem>>, vector<1x8x128xf32>
    %67 = vector.shape_cast %66 : vector<1x8x128xf32> to vector<8x128xf32>
    %68 = arith.addf %64, %67 : vector<8x128xf32>
    %cst_48 = arith.constant 8.000000e-01 : f32
    %69 = vector.broadcast %cst_48 : f32 to vector<8x128xf32>
    %70 = arith.mulf %69, %57 : vector<8x128xf32>
    %cst_49 = arith.constant 2.000000e-01 : f32
    %71 = vector.broadcast %cst_49 : f32 to vector<8x128xf32>
    %72 = arith.mulf %71, %68 : vector<8x128xf32>
    %73 = arith.addf %70, %72 : vector<8x128xf32>
    %c0_50 = arith.constant 0 : index
    %c0_51 = arith.constant 0 : index
    %74 = vector.load %arg6[%c0_50, %c0_51] : memref<8x128xf32, #tpu.memory_space<vmem>>, vector<8x128xf32>
    tpu.vector_store %arg6[%c0_50, %c0_51], %73 {strides = array<i32>} : memref<8x128xf32, #tpu.memory_space<vmem>>, vector<8x128xf32>,
    %c4_i32 = arith.constant 4 : i32
    %c0_52 = arith.constant 0 : index
    %c0_53 = arith.constant 0 : index
    %75 = vector.load %arg6[%c0_52, %c0_53] : memref<8x128xf32, #tpu.memory_space<vmem>>, vector<8x128xf32>
    %76 = arith.index_cast %c4_i32 : i32 to index
    %c0_54 = arith.constant 0 : index
    %c0_55 = arith.constant 0 : index
    %77 = vector.load %arg4[%76, %c0_54, %c0_55] : memref<8x8x128xf32, #tpu.memory_space<vmem>>, vector<1x8x128xf32>
    %78 = vector.shape_cast %77 : vector<1x8x128xf32> to vector<8x128xf32>
    %79 = vector.shape_cast %75 : vector<8x128xf32> to vector<1x8x128xf32>
    tpu.vector_store %arg4[%76, %c0_54, %c0_55], %79 {strides = array<i32>} : memref<8x8x128xf32, #tpu.memory_space<vmem>>, vector<1x8x128xf32>,
    %80 = math.tanh %75 : vector<8x128xf32>
    %c0_56 = arith.constant 0 : index
    %c0_57 = arith.constant 0 : index
    %81 = vector.load %arg3[%c0_56, %c0_57] : memref<128x128xf32, #tpu.memory_space<vmem>>, vector<128x128xf32>
    %cst_58 = arith.constant dense<0.000000e+00> : vector<8x128xf32>
    %82 = tpu.matmul %80, %81, %cst_58 {dimension_numbers = #tpu.dot_dimension_numbers<[1], [0], [0], [1], [0, 0, 1, 1], [], []>} : vector<8x128xf32>, vector<128x128xf32>, vector<8x128xf32> -> vector<8x128xf32>
    %83 = arith.index_cast %c4_i32 : i32 to index
    %c0_59 = arith.constant 0 : index
    %c0_60 = arith.constant 0 : index
    %84 = vector.load %arg2[%83, %c0_59, %c0_60] : memref<8x8x128xf32, #tpu.memory_space<vmem>>, vector<1x8x128xf32>
    %85 = vector.shape_cast %84 : vector<1x8x128xf32> to vector<8x128xf32>
    %86 = arith.addf %82, %85 : vector<8x128xf32>
    %cst_61 = arith.constant 8.000000e-01 : f32
    %87 = vector.broadcast %cst_61 : f32 to vector<8x128xf32>
    %88 = arith.mulf %87, %75 : vector<8x128xf32>
    %cst_62 = arith.constant 2.000000e-01 : f32
    %89 = vector.broadcast %cst_62 : f32 to vector<8x128xf32>
    %90 = arith.mulf %89, %86 : vector<8x128xf32>
    %91 = arith.addf %88, %90 : vector<8x128xf32>
    %c0_63 = arith.constant 0 : index
    %c0_64 = arith.constant 0 : index
    %92 = vector.load %arg6[%c0_63, %c0_64] : memref<8x128xf32, #tpu.memory_space<vmem>>, vector<8x128xf32>
    tpu.vector_store %arg6[%c0_63, %c0_64], %91 {strides = array<i32>} : memref<8x128xf32, #tpu.memory_space<vmem>>, vector<8x128xf32>,
    %c5_i32 = arith.constant 5 : i32
    %c0_65 = arith.constant 0 : index
    %c0_66 = arith.constant 0 : index
    %93 = vector.load %arg6[%c0_65, %c0_66] : memref<8x128xf32, #tpu.memory_space<vmem>>, vector<8x128xf32>
    %94 = arith.index_cast %c5_i32 : i32 to index
    %c0_67 = arith.constant 0 : index
    %c0_68 = arith.constant 0 : index
    %95 = vector.load %arg4[%94, %c0_67, %c0_68] : memref<8x8x128xf32, #tpu.memory_space<vmem>>, vector<1x8x128xf32>
    %96 = vector.shape_cast %95 : vector<1x8x128xf32> to vector<8x128xf32>
    %97 = vector.shape_cast %93 : vector<8x128xf32> to vector<1x8x128xf32>
    tpu.vector_store %arg4[%94, %c0_67, %c0_68], %97 {strides = array<i32>} : memref<8x8x128xf32, #tpu.memory_space<vmem>>, vector<1x8x128xf32>,
    %98 = math.tanh %93 : vector<8x128xf32>
    %c0_69 = arith.constant 0 : index
    %c0_70 = arith.constant 0 : index
    %99 = vector.load %arg3[%c0_69, %c0_70] : memref<128x128xf32, #tpu.memory_space<vmem>>, vector<128x128xf32>
    %cst_71 = arith.constant dense<0.000000e+00> : vector<8x128xf32>
    %100 = tpu.matmul %98, %99, %cst_71 {dimension_numbers = #tpu.dot_dimension_numbers<[1], [0], [0], [1], [0, 0, 1, 1], [], []>} : vector<8x128xf32>, vector<128x128xf32>, vector<8x128xf32> -> vector<8x128xf32>
    %101 = arith.index_cast %c5_i32 : i32 to index
    %c0_72 = arith.constant 0 : index
    %c0_73 = arith.constant 0 : index
    %102 = vector.load %arg2[%101, %c0_72, %c0_73] : memref<8x8x128xf32, #tpu.memory_space<vmem>>, vector<1x8x128xf32>
    %103 = vector.shape_cast %102 : vector<1x8x128xf32> to vector<8x128xf32>
    %104 = arith.addf %100, %103 : vector<8x128xf32>
    %cst_74 = arith.constant 8.000000e-01 : f32
    %105 = vector.broadcast %cst_74 : f32 to vector<8x128xf32>
    %106 = arith.mulf %105, %93 : vector<8x128xf32>
    %cst_75 = arith.constant 2.000000e-01 : f32
    %107 = vector.broadcast %cst_75 : f32 to vector<8x128xf32>
    %108 = arith.mulf %107, %104 : vector<8x128xf32>
    %109 = arith.addf %106, %108 : vector<8x128xf32>
    %c0_76 = arith.constant 0 : index
    %c0_77 = arith.constant 0 : index
    %110 = vector.load %arg6[%c0_76, %c0_77] : memref<8x128xf32, #tpu.memory_space<vmem>>, vector<8x128xf32>
    tpu.vector_store %arg6[%c0_76, %c0_77], %109 {strides = array<i32>} : memref<8x128xf32, #tpu.memory_space<vmem>>, vector<8x128xf32>,
    %c6_i32 = arith.constant 6 : i32
    %c0_78 = arith.constant 0 : index
    %c0_79 = arith.constant 0 : index
    %111 = vector.load %arg6[%c0_78, %c0_79] : memref<8x128xf32, #tpu.memory_space<vmem>>, vector<8x128xf32>
    %112 = arith.index_cast %c6_i32 : i32 to index
    %c0_80 = arith.constant 0 : index
    %c0_81 = arith.constant 0 : index
    %113 = vector.load %arg4[%112, %c0_80, %c0_81] : memref<8x8x128xf32, #tpu.memory_space<vmem>>, vector<1x8x128xf32>
    %114 = vector.shape_cast %113 : vector<1x8x128xf32> to vector<8x128xf32>
    %115 = vector.shape_cast %111 : vector<8x128xf32> to vector<1x8x128xf32>
    tpu.vector_store %arg4[%112, %c0_80, %c0_81], %115 {strides = array<i32>} : memref<8x8x128xf32, #tpu.memory_space<vmem>>, vector<1x8x128xf32>,
    %116 = math.tanh %111 : vector<8x128xf32>
    %c0_82 = arith.constant 0 : index
    %c0_83 = arith.constant 0 : index
    %117 = vector.load %arg3[%c0_82, %c0_83] : memref<128x128xf32, #tpu.memory_space<vmem>>, vector<128x128xf32>
    %cst_84 = arith.constant dense<0.000000e+00> : vector<8x128xf32>
    %118 = tpu.matmul %116, %117, %cst_84 {dimension_numbers = #tpu.dot_dimension_numbers<[1], [0], [0], [1], [0, 0, 1, 1], [], []>} : vector<8x128xf32>, vector<128x128xf32>, vector<8x128xf32> -> vector<8x128xf32>
    %119 = arith.index_cast %c6_i32 : i32 to index
    %c0_85 = arith.constant 0 : index
    %c0_86 = arith.constant 0 : index
    %120 = vector.load %arg2[%119, %c0_85, %c0_86] : memref<8x8x128xf32, #tpu.memory_space<vmem>>, vector<1x8x128xf32>
    %121 = vector.shape_cast %120 : vector<1x8x128xf32> to vector<8x128xf32>
    %122 = arith.addf %118, %121 : vector<8x128xf32>
    %cst_87 = arith.constant 8.000000e-01 : f32
    %123 = vector.broadcast %cst_87 : f32 to vector<8x128xf32>
    %124 = arith.mulf %123, %111 : vector<8x128xf32>
    %cst_88 = arith.constant 2.000000e-01 : f32
    %125 = vector.broadcast %cst_88 : f32 to vector<8x128xf32>
    %126 = arith.mulf %125, %122 : vector<8x128xf32>
    %127 = arith.addf %124, %126 : vector<8x128xf32>
    %c0_89 = arith.constant 0 : index
    %c0_90 = arith.constant 0 : index
    %128 = vector.load %arg6[%c0_89, %c0_90] : memref<8x128xf32, #tpu.memory_space<vmem>>, vector<8x128xf32>
    tpu.vector_store %arg6[%c0_89, %c0_90], %127 {strides = array<i32>} : memref<8x128xf32, #tpu.memory_space<vmem>>, vector<8x128xf32>,
    %c7_i32 = arith.constant 7 : i32
    %c0_91 = arith.constant 0 : index
    %c0_92 = arith.constant 0 : index
    %129 = vector.load %arg6[%c0_91, %c0_92] : memref<8x128xf32, #tpu.memory_space<vmem>>, vector<8x128xf32>
    %130 = arith.index_cast %c7_i32 : i32 to index
    %c0_93 = arith.constant 0 : index
    %c0_94 = arith.constant 0 : index
    %131 = vector.load %arg4[%130, %c0_93, %c0_94] : memref<8x8x128xf32, #tpu.memory_space<vmem>>, vector<1x8x128xf32>
    %132 = vector.shape_cast %131 : vector<1x8x128xf32> to vector<8x128xf32>
    %133 = vector.shape_cast %129 : vector<8x128xf32> to vector<1x8x128xf32>
    tpu.vector_store %arg4[%130, %c0_93, %c0_94], %133 {strides = array<i32>} : memref<8x8x128xf32, #tpu.memory_space<vmem>>, vector<1x8x128xf32>,
    %134 = math.tanh %129 : vector<8x128xf32>
    %c0_95 = arith.constant 0 : index
    %c0_96 = arith.constant 0 : index
    %135 = vector.load %arg3[%c0_95, %c0_96] : memref<128x128xf32, #tpu.memory_space<vmem>>, vector<128x128xf32>
    %cst_97 = arith.constant dense<0.000000e+00> : vector<8x128xf32>
    %136 = tpu.matmul %134, %135, %cst_97 {dimension_numbers = #tpu.dot_dimension_numbers<[1], [0], [0], [1], [0, 0, 1, 1], [], []>} : vector<8x128xf32>, vector<128x128xf32>, vector<8x128xf32> -> vector<8x128xf32>
    %137 = arith.index_cast %c7_i32 : i32 to index
    %c0_98 = arith.constant 0 : index
    %c0_99 = arith.constant 0 : index
    %138 = vector.load %arg2[%137, %c0_98, %c0_99] : memref<8x8x128xf32, #tpu.memory_space<vmem>>, vector<1x8x128xf32>
    %139 = vector.shape_cast %138 : vector<1x8x128xf32> to vector<8x128xf32>
    %140 = arith.addf %136, %139 : vector<8x128xf32>
    %cst_100 = arith.constant 8.000000e-01 : f32
    %141 = vector.broadcast %cst_100 : f32 to vector<8x128xf32>
    %142 = arith.mulf %141, %129 : vector<8x128xf32>
    %cst_101 = arith.constant 2.000000e-01 : f32
    %143 = vector.broadcast %cst_101 : f32 to vector<8x128xf32>
    %144 = arith.mulf %143, %140 : vector<8x128xf32>
    %145 = arith.addf %142, %144 : vector<8x128xf32>
    %c0_102 = arith.constant 0 : index
    %c0_103 = arith.constant 0 : index
    %146 = vector.load %arg6[%c0_102, %c0_103] : memref<8x128xf32, #tpu.memory_space<vmem>>, vector<8x128xf32>
    tpu.vector_store %arg6[%c0_102, %c0_103], %145 {strides = array<i32>} : memref<8x128xf32, #tpu.memory_space<vmem>>, vector<8x128xf32>,
    %c8_i32 = arith.constant 8 : i32
    %c0_i32_104 = arith.constant 0 : i32
    %147 = arith.cmpi eq, %arg0, %c0_i32_104 : i32
    %148 = arith.extui %147 : i1 to i32
    %c0_i32_105 = arith.constant 0 : i32
    %149 = arith.cmpi ne, %148, %c0_i32_105 : i32
    scf.if %149 {
      %c0_106 = arith.constant 0 : index
      %c0_107 = arith.constant 0 : index
      %150 = vector.load %arg6[%c0_106, %c0_107] : memref<8x128xf32, #tpu.memory_space<vmem>>, vector<8x128xf32>
      %c0_108 = arith.constant 0 : index
      %c0_109 = arith.constant 0 : index
      %151 = vector.load %arg5[%c0_108, %c0_109] : memref<8x128xf32, #tpu.memory_space<vmem>>, vector<8x128xf32>
      tpu.vector_store %arg5[%c0_108, %c0_109], %150 {strides = array<i32>} : memref<8x128xf32, #tpu.memory_space<vmem>>, vector<8x128xf32>,
    } else {
    }
    return
  }
  func.func @transform_0(%arg0: i32) -> (i32, i32) {
    %c0_i32 = arith.constant 0 : i32
    %c0_i32_0 = arith.constant 0 : i32
    %c0_i32_1 = arith.constant 0 : i32
    return %c0_i32, %c0_i32_0 : i32, i32
  }
  func.func @transform_1(%arg0: i32) -> (i32, i32, i32) {
    %c0_i32 = arith.constant 0 : i32
    %c0_i32_0 = arith.constant 0 : i32
    %c0_i32_1 = arith.constant 0 : i32
    return %arg0, %c0_i32, %c0_i32_0 : i32, i32, i32
  }
  func.func @transform_2(%arg0: i32) -> (i32, i32) {
    %c0_i32 = arith.constant 0 : i32
    %c0_i32_0 = arith.constant 0 : i32
    %c0_i32_1 = arith.constant 0 : i32
    return %c0_i32, %c0_i32_0 : i32, i32
  }
  func.func @transform_3(%arg0: i32) -> (i32, i32, i32) {
    %c0_i32 = arith.constant 0 : i32
    %c0_i32_0 = arith.constant 0 : i32
    %c0_i32_1 = arith.constant 0 : i32
    return %arg0, %c0_i32, %c0_i32_0 : i32, i32, i32
  }
  func.func @transform_4(%arg0: i32) -> (i32, i32) {
    %c0_i32 = arith.constant 0 : i32
    %c0_i32_0 = arith.constant 0 : i32
    %c0_i32_1 = arith.constant 0 : i32
    return %c0_i32, %c0_i32_0 : i32, i32
  }
}

</mosaic_0001>

<llo_original>
// kernel: tpu_custom_call.1
$region0: #{tpu_custom_call.1}
  #allocation0 [shape = 'u32[]', space=smem, size = 0x4, offset = 0x4, fixed_abs, tag = 'smem constant byte address 0x4 - core index']
  #allocation1 [shape = 'u32[144,128]{1,0:T(1,128)}', space=vmem, size = 0x12000, scoped, tag = 'internal scratch']
  #allocation2 [shape = 'f32[8,128]{1,0:T(8,128)}', space=vmem, size = 0x1000, scoped, tag = 'scratch operand']
  %s0 = inlined_call_operand.hbm [shape: f32[8,128], index: 0, kind: input, shape index: {}]
  %s1 = inlined_call_operand.hbm [shape: f32[8,8,128], index: 1, kind: input, shape index: {}]
  %s2 = inlined_call_operand.hbm [shape: f32[128,128], index: 2, kind: input, shape index: {}]
  %s3 = inlined_call_operand.hbm [shape: f32[8,8,128], index: 3, kind: output, shape index: {0}]
  %s4 = inlined_call_operand.hbm [shape: f32[8,128], index: 4, kind: output, shape index: {1}]
  %5 = xla_tuple %s3, %s4
  %s6 = sld [smem:[#allocation0]]
  $region50: #{tpu_custom_call.1} parent=0
    _
  %s8 = ssub.s32 1, %s6
  %s9 = scalar_select 0, %s8, %s6
  $region1: #{tpu_custom_call.1} parent=0
    #allocation3 [shape = 'u8[4096]{0}', space=vmem, size = 0x1000, scoped, tag = 'input window, operand 0, single buffered']
    #allocation4 [shape = 's32[1]{0}', space=sflag, size = 0x4, scoped, tag = 'scoped memory for tpu_custom_call.1']
    #allocation5 [shape = 's32[1]{0}', space=sflag, size = 0x4, scoped, tag = 'scoped memory for tpu_custom_call.1']
    #allocation6 [shape = 'u8[32768]{0}', space=vmem, size = 0x8000, scoped, tag = 'input window, operand 1, single buffered']
    #allocation7 [shape = 's32[1]{0}', space=sflag, size = 0x4, scoped, tag = 'scoped memory for tpu_custom_call.1']
    #allocation8 [shape = 'u8[65536]{0}', space=vmem, size = 0x10000, scoped, tag = 'input window, operand 2, single buffered']
    #allocation9 [shape = 'u8[32768]{0}', space=vmem, size = 0x8000, scoped, tag = 'output window, operand 0, single buffered']
    #allocation10 [shape = 'u8[4096]{0}', space=vmem, size = 0x1000, scoped, tag = 'output window, operand 1, single buffered']
    #allocation11 [shape = 's32[1]{0}', space=sflag, size = 0x4, scoped, tag = 'scoped memory for tpu_custom_call.1']
    %10 = vsyncpa [#allocation4], 0
    %11 = vsyncpa [#allocation7], 0
    %12 = vsyncpa [#allocation5], 0
    %13 = vsyncpa [#allocation11], 0
    // Predicated region
    $region2: #{tpu_custom_call.1} parent=1 // pred_check
      _
    $region3: #{tpu_custom_call.1} parent=1 // pred_check_branch
      %15 = sbr.rel (0) target = $region5
    $region4: #{tpu_custom_call.1} parent=1 // pred_region
      %s17 = ssub.s32 128, 128
      %18 = vsyncadd [#allocation4], %s17
      %s20 = sshll.u32 [#allocation3], 4
      %s21 = int_to_ptr.vmem [resolvable:$true] %s20
      %23 = dma.hbm_to_vmem [thread:$0]  %s0, 128, %s21, [#allocation4]
    $region5: #{tpu_custom_call.1} parent=1 // pred_fallthru
      _
    // Predicated region
    $region6: #{tpu_custom_call.1} parent=1 // pred_check
      _
    $region7: #{tpu_custom_call.1} parent=1 // pred_check_branch
      %25 = sbr.rel (0) target = $region9
    $region8: #{tpu_custom_call.1} parent=1 // pred_region
      %s27 = ssub.s32 1024, 1024
      %28 = vsyncadd [#allocation7], %s27
      %s29 = sshll.u32 [#allocation6], 4
      %s30 = int_to_ptr.vmem [resolvable:$true] %s29
      %35 = dma.hbm_to_vmem [thread:$0]  %s1, 1024, %s30, [#allocation7], 128, 128, 8
    $region9: #{tpu_custom_call.1} parent=1 // pred_fallthru
      _
    // Predicated region
    $region10: #{tpu_custom_call.1} parent=1 // pred_check
      _
    $region11: #{tpu_custom_call.1} parent=1 // pred_check_branch
      %37 = sbr.rel (0) target = $region13
    $region12: #{tpu_custom_call.1} parent=1 // pred_region
      %s39 = ssub.s32 2048, 2048
      %40 = vsyncadd [#allocation7], %s39
      %s41 = sshll.u32 [#allocation8], 4
      %s42 = int_to_ptr.vmem [resolvable:$true] %s41
      %47 = dma.hbm_to_vmem [thread:$0]  %s2, 2048, %s42, [#allocation7], 128, 128, 8
    $region13: #{tpu_custom_call.1} parent=1 // pred_fallthru
      _
    // Predicated region
    $region14: #{tpu_custom_call.1} parent=1 // pred_check
      _
    $region15: #{tpu_custom_call.1} parent=1 // pred_check_branch
      %49 = sbr.rel (0) target = $region17
    $region16: #{tpu_custom_call.1} parent=1 // pred_region
      %50 = dma.done [#allocation4], 128
    $region17: #{tpu_custom_call.1} parent=1 // pred_fallthru
      _
    // Predicated region
    $region18: #{tpu_custom_call.1} parent=1 // pred_check
      _
    $region19: #{tpu_custom_call.1} parent=1 // pred_check_branch
      %52 = sbr.rel (0) target = $region21
    $region20: #{tpu_custom_call.1} parent=1 // pred_region
      %53 = dma.done [#allocation7], 1024
    $region21: #{tpu_custom_call.1} parent=1 // pred_fallthru
      _
    // Predicated region
    $region22: #{tpu_custom_call.1} parent=1 // pred_check
      _
    $region23: #{tpu_custom_call.1} parent=1 // pred_check_branch
      %55 = sbr.rel (0) target = $region25
    $region24: #{tpu_custom_call.1} parent=1 // pred_region
      %56 = dma.done [#allocation7], 2048
    $region25: #{tpu_custom_call.1} parent=1 // pred_fallthru
      _
    %p57 = scmp.eq.s32.totalorder 0, 0
    // Predicated region
    $region26: #{tpu_custom_call.1} parent=1 // pred_check
      %p58 = pneg %p57
    $region27: #{tpu_custom_call.1} parent=1 // pred_check_branch
      %60 = sbr.rel (%p58) target = $region29
    $region28: #{tpu_custom_call.1} parent=1 // pred_region
      %v61 = vld [vmem:[#allocation3] sm:$0xff]
      %62 = vst [vmem:[#allocation2] sm:$0xff] %v61
    $region29: #{tpu_custom_call.1} parent=1 // pred_fallthru
      _
    %v63 = vld [vmem:[#allocation2] sm:$0xff]
    %64 = vst [vmem:[#allocation9] sm:$0xff] %v63
    %v65 = vtanh.pop %v63
    %v66 = vld [vmem:[#allocation8] sm:$0xff]
    %v67 = vld [vmem:[#allocation8 + $0x8] sm:$0xff]
    %v68 = vld [vmem:[#allocation8 + $0x10] sm:$0xff]
    %v69 = vld [vmem:[#allocation8 + $0x18] sm:$0xff]
    %v70 = vld [vmem:[#allocation8 + $0x20] sm:$0xff]
    %v71 = vld [vmem:[#allocation8 + $0x28] sm:$0xff]
    %v72 = vld [vmem:[#allocation8 + $0x30] sm:$0xff]
    %v73 = vld [vmem:[#allocation8 + $0x38] sm:$0xff]
    %v74 = vld [vmem:[#allocation8 + $0x40] sm:$0xff]
    %v75 = vld [vmem:[#allocation8 + $0x48] sm:$0xff]
    %v76 = vld [vmem:[#allocation8 + $0x50] sm:$0xff]
    %v77 = vld [vmem:[#allocation8 + $0x58] sm:$0xff]
    %v78 = vld [vmem:[#allocation8 + $0x60] sm:$0xff]
    %v79 = vld [vmem:[#allocation8 + $0x68] sm:$0xff]
    %v80 = vld [vmem:[#allocation8 + $0x70] sm:$0xff]
    %v81 = vld [vmem:[#allocation8 + $0x78] sm:$0xff]
    %v82 = vld [vmem:[#allocation6] sm:$0xff]
    %83 = vmatprep.subr.mxu0 0.0
    %84 = vmatpush1.msra.mxu0 %v81
    %85 = vmatprep.subr.mxu0 0.0
    %86 = vmatpush1.msra.mxu0 %v80
    %87 = vmatprep.subr.mxu0 0.0
    %88 = vmatpush1.msra.mxu0 %v79
    %89 = vmatprep.subr.mxu0 0.0
    %90 = vmatpush1.msra.mxu0 %v78
    %91 = vmatprep.subr.mxu0 0.0
    %92 = vmatpush1.msra.mxu0 %v77
    %93 = vmatprep.subr.mxu0 0.0
    %94 = vmatpush1.msra.mxu0 %v76
    %95 = vmatprep.subr.mxu0 0.0
    %96 = vmatpush1.msra.mxu0 %v75
    %97 = vmatprep.subr.mxu0 0.0
    %98 = vmatpush1.msra.mxu0 %v74
    %99 = vmatprep.subr.mxu0 0.0
    %100 = vmatpush1.msra.mxu0 %v73
    %101 = vmatprep.subr.mxu0 0.0
    %102 = vmatpush1.msra.mxu0 %v72
    %103 = vmatprep.subr.mxu0 0.0
    %104 = vmatpush1.msra.mxu0 %v71
    %105 = vmatprep.subr.mxu0 0.0
    %106 = vmatpush1.msra.mxu0 %v70
    %107 = vmatprep.subr.mxu0 0.0
    %108 = vmatpush1.msra.mxu0 %v69
    %109 = vmatprep.subr.mxu0 0.0
    %110 = vmatpush1.msra.mxu0 %v68
    %111 = vmatprep.subr.mxu0 0.0
    %112 = vmatpush1.msra.mxu0 %v67
    %113 = vmatprep.subr.mxu0 0.0
    %114 = vmatpush1.msra.mxu0 %v66
    %115 = vmatprep.subr.mxu0 0.0
    %116 = vmatpush2.msra.mxu0 0.0
    %117 = vmatprep.subr.mxu0 0.0
    %118 = vmatpush2.msra.mxu0 0.0
    %119 = vmatprep.subr.mxu0 0.0
    %120 = vmatpush2.msra.mxu0 0.0
    %121 = vmatprep.subr.mxu0 0.0
    %122 = vmatpush2.msra.mxu0 0.0
    %123 = vmatprep.subr.mxu0 0.0
    %124 = vmatpush2.msra.mxu0 0.0
    %125 = vmatprep.subr.mxu0 0.0
    %126 = vmatpush2.msra.mxu0 0.0
    %127 = vmatprep.subr.mxu0 0.0
    %128 = vmatpush2.msra.mxu0 0.0
    %129 = vmatprep.subr.mxu0 0.0
    %130 = vmatpush2.msra.mxu0 0.0
    %131 = vmatprep.subr.mxu0 0.0
    %132 = vmatpush2.msra.mxu0 0.0
    %133 = vmatprep.subr.mxu0 0.0
    %134 = vmatpush2.msra.mxu0 0.0
    %135 = vmatprep.subr.mxu0 0.0
    %136 = vmatpush2.msra.mxu0 0.0
    %137 = vmatprep.subr.mxu0 0.0
    %138 = vmatpush2.msra.mxu0 0.0
    %139 = vmatprep.subr.mxu0 0.0
    %140 = vmatpush2.msra.mxu0 0.0
    %141 = vmatprep.subr.mxu0 0.0
    %142 = vmatpush2.msra.mxu0 0.0
    %143 = vmatprep.subr.mxu0 0.0
    %144 = vmatpush2.msra.mxu0 0.0
    %145 = vmatprep.subr.mxu0 0.0
    %146 = vmatpush2.msra.mxu0 0.0
    %147 = vmatprep.mubr.f32.mxu0 0.0
    %148 = vmatmul.mubr.f32.gmra.mxu0 %v65
    %v149 = vpop.f32.mrf.mxu0
    %v150 = vadd.f32 %v82, %v149
    %v151 = vpop.f32.mrf.mxu0
    %152 = vdwg.mxu0
    %v153 = vmul.f32 %v63, 0.8
    %v154 = vmul.f32 %v150, 0.2
    %v155 = vadd.f32 %v153, %v154
    %156 = vst [vmem:[#allocation2] sm:$0xff] %v155
    %v157 = vld [vmem:[#allocation2] sm:$0xff]
    %s158 = scalar_lea.vmem [#allocation9], 8
    %159 = vst [vmem:[%s158] sm:$0xff] %v157
    %v160 = vtanh.pop %v157
    %v161 = vld [vmem:[#allocation8] sm:$0xff]
    %v162 = vld [vmem:[#allocation8 + $0x8] sm:$0xff]
    %v163 = vld [vmem:[#allocation8 + $0x10] sm:$0xff]
    %v164 = vld [vmem:[#allocation8 + $0x18] sm:$0xff]
    %v165 = vld [vmem:[#allocation8 + $0x20] sm:$0xff]
    %v166 = vld [vmem:[#allocation8 + $0x28] sm:$0xff]
    %v167 = vld [vmem:[#allocation8 + $0x30] sm:$0xff]
    %v168 = vld [vmem:[#allocation8 + $0x38] sm:$0xff]
    %v169 = vld [vmem:[#allocation8 + $0x40] sm:$0xff]
    %v170 = vld [vmem:[#allocation8 + $0x48] sm:$0xff]
    %v171 = vld [vmem:[#allocation8 + $0x50] sm:$0xff]
    %v172 = vld [vmem:[#allocation8 + $0x58] sm:$0xff]
    %v173 = vld [vmem:[#allocation8 + $0x60] sm:$0xff]
    %v174 = vld [vmem:[#allocation8 + $0x68] sm:$0xff]
    %v175 = vld [vmem:[#allocation8 + $0x70] sm:$0xff]
    %v176 = vld [vmem:[#allocation8 + $0x78] sm:$0xff]
    %s177 = scalar_lea.vmem [#allocation6], 8
    %v178 = vld [vmem:[%s177] sm:$0xff]
    %179 = vmatprep.subr.mxu0 0.0
    %180 = vmatpush1.msra.mxu0 %v176
    %181 = vmatprep.subr.mxu0 0.0
    %182 = vmatpush1.msra.mxu0 %v175
    %183 = vmatprep.subr.mxu0 0.0
    %184 = vmatpush1.msra.mxu0 %v174
    %185 = vmatprep.subr.mxu0 0.0
    %186 = vmatpush1.msra.mxu0 %v173
    %187 = vmatprep.subr.mxu0 0.0
    %188 = vmatpush1.msra.mxu0 %v172
    %189 = vmatprep.subr.mxu0 0.0
    %190 = vmatpush1.msra.mxu0 %v171
    %191 = vmatprep.subr.mxu0 0.0
    %192 = vmatpush1.msra.mxu0 %v170
    %193 = vmatprep.subr.mxu0 0.0
    %194 = vmatpush1.msra.mxu0 %v169
    %195 = vmatprep.subr.mxu0 0.0
    %196 = vmatpush1.msra.mxu0 %v168
    %197 = vmatprep.subr.mxu0 0.0
    %198 = vmatpush1.msra.mxu0 %v167
    %199 = vmatprep.subr.mxu0 0.0
    %200 = vmatpush1.msra.mxu0 %v166
    %201 = vmatprep.subr.mxu0 0.0
    %202 = vmatpush1.msra.mxu0 %v165
    %203 = vmatprep.subr.mxu0 0.0
    %204 = vmatpush1.msra.mxu0 %v164
    %205 = vmatprep.subr.mxu0 0.0
    %206 = vmatpush1.msra.mxu0 %v163
    %207 = vmatprep.subr.mxu0 0.0
    %208 = vmatpush1.msra.mxu0 %v162
    %209 = vmatprep.subr.mxu0 0.0
    %210 = vmatpush1.msra.mxu0 %v161
    %211 = vmatprep.subr.mxu0 0.0
    %212 = vmatpush2.msra.mxu0 0.0
    %213 = vmatprep.subr.mxu0 0.0
    %214 = vmatpush2.msra.mxu0 0.0
    %215 = vmatprep.subr.mxu0 0.0
    %216 = vmatpush2.msra.mxu0 0.0
    %217 = vmatprep.subr.mxu0 0.0
    %218 = vmatpush2.msra.mxu0 0.0
    %219 = vmatprep.subr.mxu0 0.0
    %220 = vmatpush2.msra.mxu0 0.0
    %221 = vmatprep.subr.mxu0 0.0
    %222 = vmatpush2.msra.mxu0 0.0
    %223 = vmatprep.subr.mxu0 0.0
    %224 = vmatpush2.msra.mxu0 0.0
    %225 = vmatprep.subr.mxu0 0.0
    %226 = vmatpush2.msra.mxu0 0.0
    %227 = vmatprep.subr.mxu0 0.0
    %228 = vmatpush2.msra.mxu0 0.0
    %229 = vmatprep.subr.mxu0 0.0
    %230 = vmatpush2.msra.mxu0 0.0
    %231 = vmatprep.subr.mxu0 0.0
    %232 = vmatpush2.msra.mxu0 0.0
    %233 = vmatprep.subr.mxu0 0.0
    %234 = vmatpush2.msra.mxu0 0.0
    %235 = vmatprep.subr.mxu0 0.0
    %236 = vmatpush2.msra.mxu0 0.0
    %237 = vmatprep.subr.mxu0 0.0
    %238 = vmatpush2.msra.mxu0 0.0
    %239 = vmatprep.subr.mxu0 0.0
    %240 = vmatpush2.msra.mxu0 0.0
    %241 = vmatprep.subr.mxu0 0.0
    %242 = vmatpush2.msra.mxu0 0.0
    %243 = vmatprep.mubr.f32.mxu0 0.0
    %244 = vmatmul.mubr.f32.gmra.mxu0 %v160
    %v245 = vpop.f32.mrf.mxu0
    %v246 = vadd.f32 %v178, %v245
    %v247 = vpop.f32.mrf.mxu0
    %248 = vdwg.mxu0
    %v249 = vmul.f32 %v157, 0.8
    %v250 = vmul.f32 %v246, 0.2
    %v251 = vadd.f32 %v249, %v250
    %252 = vst [vmem:[#allocation2] sm:$0xff] %v251
    %v253 = vld [vmem:[#allocation2] sm:$0xff]
    %s254 = scalar_lea.vmem [#allocation9], 16
    %255 = vst [vmem:[%s254] sm:$0xff] %v253
    %v256 = vtanh.pop %v253
    %v257 = vld [vmem:[#allocation8] sm:$0xff]
    %v258 = vld [vmem:[#allocation8 + $0x8] sm:$0xff]
    %v259 = vld [vmem:[#allocation8 + $0x10] sm:$0xff]
    %v260 = vld [vmem:[#allocation8 + $0x18] sm:$0xff]
    %v261 = vld [vmem:[#allocation8 + $0x20] sm:$0xff]
    %v262 = vld [vmem:[#allocation8 + $0x28] sm:$0xff]
    %v263 = vld [vmem:[#allocation8 + $0x30] sm:$0xff]
    %v264 = vld [vmem:[#allocation8 + $0x38] sm:$0xff]
    %v265 = vld [vmem:[#allocation8 + $0x40] sm:$0xff]
    %v266 = vld [vmem:[#allocation8 + $0x48] sm:$0xff]
    %v267 = vld [vmem:[#allocation8 + $0x50] sm:$0xff]
    %v268 = vld [vmem:[#allocation8 + $0x58] sm:$0xff]
    %v269 = vld [vmem:[#allocation8 + $0x60] sm:$0xff]
    %v270 = vld [vmem:[#allocation8 + $0x68] sm:$0xff]
    %v271 = vld [vmem:[#allocation8 + $0x70] sm:$0xff]
    %v272 = vld [vmem:[#allocation8 + $0x78] sm:$0xff]
    %s273 = scalar_lea.vmem [#allocation6], 16
    %v274 = vld [vmem:[%s273] sm:$0xff]
    %275 = vmatprep.subr.mxu0 0.0
    %276 = vmatpush1.msra.mxu0 %v272
    %277 = vmatprep.subr.mxu0 0.0
    %278 = vmatpush1.msra.mxu0 %v271
    %279 = vmatprep.subr.mxu0 0.0
    %280 = vmatpush1.msra.mxu0 %v270
    %281 = vmatprep.subr.mxu0 0.0
    %282 = vmatpush1.msra.mxu0 %v269
    %283 = vmatprep.subr.mxu0 0.0
    %284 = vmatpush1.msra.mxu0 %v268
    %285 = vmatprep.subr.mxu0 0.0
    %286 = vmatpush1.msra.mxu0 %v267
    %287 = vmatprep.subr.mxu0 0.0
    %288 = vmatpush1.msra.mxu0 %v266
    %289 = vmatprep.subr.mxu0 0.0
    %290 = vmatpush1.msra.mxu0 %v265
    %291 = vmatprep.subr.mxu0 0.0
    %292 = vmatpush1.msra.mxu0 %v264
    %293 = vmatprep.subr.mxu0 0.0
    %294 = vmatpush1.msra.mxu0 %v263
    %295 = vmatprep.subr.mxu0 0.0
    %296 = vmatpush1.msra.mxu0 %v262
    %297 = vmatprep.subr.mxu0 0.0
    %298 = vmatpush1.msra.mxu0 %v261
    %299 = vmatprep.subr.mxu0 0.0
    %300 = vmatpush1.msra.mxu0 %v260
    %301 = vmatprep.subr.mxu0 0.0
    %302 = vmatpush1.msra.mxu0 %v259
    %303 = vmatprep.subr.mxu0 0.0
    %304 = vmatpush1.msra.mxu0 %v258
    %305 = vmatprep.subr.mxu0 0.0
    %306 = vmatpush1.msra.mxu0 %v257
    %307 = vmatprep.subr.mxu0 0.0
    %308 = vmatpush2.msra.mxu0 0.0
    %309 = vmatprep.subr.mxu0 0.0
    %310 = vmatpush2.msra.mxu0 0.0
    %311 = vmatprep.subr.mxu0 0.0
    %312 = vmatpush2.msra.mxu0 0.0
    %313 = vmatprep.subr.mxu0 0.0
    %314 = vmatpush2.msra.mxu0 0.0
    %315 = vmatprep.subr.mxu0 0.0
    %316 = vmatpush2.msra.mxu0 0.0
    %317 = vmatprep.subr.mxu0 0.0
    %318 = vmatpush2.msra.mxu0 0.0
    %319 = vmatprep.subr.mxu0 0.0
    %320 = vmatpush2.msra.mxu0 0.0
    %321 = vmatprep.subr.mxu0 0.0
    %322 = vmatpush2.msra.mxu0 0.0
    %323 = vmatprep.subr.mxu0 0.0
    %324 = vmatpush2.msra.mxu0 0.0
    %325 = vmatprep.subr.mxu0 0.0
    %326 = vmatpush2.msra.mxu0 0.0
    %327 = vmatprep.subr.mxu0 0.0
    %328 = vmatpush2.msra.mxu0 0.0
    %329 = vmatprep.subr.mxu0 0.0
    %330 = vmatpush2.msra.mxu0 0.0
    %331 = vmatprep.subr.mxu0 0.0
    %332 = vmatpush2.msra.mxu0 0.0
    %333 = vmatprep.subr.mxu0 0.0
    %334 = vmatpush2.msra.mxu0 0.0
    %335 = vmatprep.subr.mxu0 0.0
    %336 = vmatpush2.msra.mxu0 0.0
    %337 = vmatprep.subr.mxu0 0.0
    %338 = vmatpush2.msra.mxu0 0.0
    %339 = vmatprep.mubr.f32.mxu0 0.0
    %340 = vmatmul.mubr.f32.gmra.mxu0 %v256
    %v341 = vpop.f32.mrf.mxu0
    %v342 = vadd.f32 %v274, %v341
    %v343 = vpop.f32.mrf.mxu0
    %344 = vdwg.mxu0
    %v345 = vmul.f32 %v253, 0.8
    %v346 = vmul.f32 %v342, 0.2
    %v347 = vadd.f32 %v345, %v346
    %348 = vst [vmem:[#allocation2] sm:$0xff] %v347
    %v349 = vld [vmem:[#allocation2] sm:$0xff]
    %s350 = scalar_lea.vmem [#allocation9], 24
    %351 = vst [vmem:[%s350] sm:$0xff] %v349
    %v352 = vtanh.pop %v349
    %v353 = vld [vmem:[#allocation8] sm:$0xff]
    %v354 = vld [vmem:[#allocation8 + $0x8] sm:$0xff]
    %v355 = vld [vmem:[#allocation8 + $0x10] sm:$0xff]
    %v356 = vld [vmem:[#allocation8 + $0x18] sm:$0xff]
    %v357 = vld [vmem:[#allocation8 + $0x20] sm:$0xff]
    %v358 = vld [vmem:[#allocation8 + $0x28] sm:$0xff]
    %v359 = vld [vmem:[#allocation8 + $0x30] sm:$0xff]
    %v360 = vld [vmem:[#allocation8 + $0x38] sm:$0xff]
    %v361 = vld [vmem:[#allocation8 + $0x40] sm:$0xff]
    %v362 = vld [vmem:[#allocation8 + $0x48] sm:$0xff]
    %v363 = vld [vmem:[#allocation8 + $0x50] sm:$0xff]
    %v364 = vld [vmem:[#allocation8 + $0x58] sm:$0xff]
    %v365 = vld [vmem:[#allocation8 + $0x60] sm:$0xff]
    %v366 = vld [vmem:[#allocation8 + $0x68] sm:$0xff]
    %v367 = vld [vmem:[#allocation8 + $0x70] sm:$0xff]
    %v368 = vld [vmem:[#allocation8 + $0x78] sm:$0xff]
    %s369 = scalar_lea.vmem [#allocation6], 24
    %v370 = vld [vmem:[%s369] sm:$0xff]
    %371 = vmatprep.subr.mxu0 0.0
    %372 = vmatpush1.msra.mxu0 %v368
    %373 = vmatprep.subr.mxu0 0.0
    %374 = vmatpush1.msra.mxu0 %v367
    %375 = vmatprep.subr.mxu0 0.0
    %376 = vmatpush1.msra.mxu0 %v366
    %377 = vmatprep.subr.mxu0 0.0
    %378 = vmatpush1.msra.mxu0 %v365
    %379 = vmatprep.subr.mxu0 0.0
    %380 = vmatpush1.msra.mxu0 %v364
    %381 = vmatprep.subr.mxu0 0.0
    %382 = vmatpush1.msra.mxu0 %v363
    %383 = vmatprep.subr.mxu0 0.0
    %384 = vmatpush1.msra.mxu0 %v362
    %385 = vmatprep.subr.mxu0 0.0
    %386 = vmatpush1.msra.mxu0 %v361
    %387 = vmatprep.subr.mxu0 0.0
    %388 = vmatpush1.msra.mxu0 %v360
    %389 = vmatprep.subr.mxu0 0.0
    %390 = vmatpush1.msra.mxu0 %v359
    %391 = vmatprep.subr.mxu0 0.0
    %392 = vmatpush1.msra.mxu0 %v358
    %393 = vmatprep.subr.mxu0 0.0
    %394 = vmatpush1.msra.mxu0 %v357
    %395 = vmatprep.subr.mxu0 0.0
    %396 = vmatpush1.msra.mxu0 %v356
    %397 = vmatprep.subr.mxu0 0.0
    %398 = vmatpush1.msra.mxu0 %v355
    %399 = vmatprep.subr.mxu0 0.0
    %400 = vmatpush1.msra.mxu0 %v354
    %401 = vmatprep.subr.mxu0 0.0
    %402 = vmatpush1.msra.mxu0 %v353
    %403 = vmatprep.subr.mxu0 0.0
    %404 = vmatpush2.msra.mxu0 0.0
    %405 = vmatprep.subr.mxu0 0.0
    %406 = vmatpush2.msra.mxu0 0.0
    %407 = vmatprep.subr.mxu0 0.0
    %408 = vmatpush2.msra.mxu0 0.0
    %409 = vmatprep.subr.mxu0 0.0
    %410 = vmatpush2.msra.mxu0 0.0
    %411 = vmatprep.subr.mxu0 0.0
    %412 = vmatpush2.msra.mxu0 0.0
    %413 = vmatprep.subr.mxu0 0.0
    %414 = vmatpush2.msra.mxu0 0.0
    %415 = vmatprep.subr.mxu0 0.0
    %416 = vmatpush2.msra.mxu0 0.0
    %417 = vmatprep.subr.mxu0 0.0
    %418 = vmatpush2.msra.mxu0 0.0
    %419 = vmatprep.subr.mxu0 0.0
    %420 = vmatpush2.msra.mxu0 0.0
    %421 = vmatprep.subr.mxu0 0.0
    %422 = vmatpush2.msra.mxu0 0.0
    %423 = vmatprep.subr.mxu0 0.0
    %424 = vmatpush2.msra.mxu0 0.0
    %425 = vmatprep.subr.mxu0 0.0
    %426 = vmatpush2.msra.mxu0 0.0
    %427 = vmatprep.subr.mxu0 0.0
    %428 = vmatpush2.msra.mxu0 0.0
    %429 = vmatprep.subr.mxu0 0.0
    %430 = vmatpush2.msra.mxu0 0.0
    %431 = vmatprep.subr.mxu0 0.0
    %432 = vmatpush2.msra.mxu0 0.0
    %433 = vmatprep.subr.mxu0 0.0
    %434 = vmatpush2.msra.mxu0 0.0
    %435 = vmatprep.mubr.f32.mxu0 0.0
    %436 = vmatmul.mubr.f32.gmra.mxu0 %v352
    %v437 = vpop.f32.mrf.mxu0
    %v438 = vadd.f32 %v370, %v437
    %v439 = vpop.f32.mrf.mxu0
    %440 = vdwg.mxu0
    %v441 = vmul.f32 %v349, 0.8
    %v442 = vmul.f32 %v438, 0.2
    %v443 = vadd.f32 %v441, %v442
    %444 = vst [vmem:[#allocation2] sm:$0xff] %v443
    %v445 = vld [vmem:[#allocation2] sm:$0xff]
    %s446 = scalar_lea.vmem [#allocation9], 32
    %447 = vst [vmem:[%s446] sm:$0xff] %v445
    %v448 = vtanh.pop %v445
    %v449 = vld [vmem:[#allocation8] sm:$0xff]
    %v450 = vld [vmem:[#allocation8 + $0x8] sm:$0xff]
    %v451 = vld [vmem:[#allocation8 + $0x10] sm:$0xff]
    %v452 = vld [vmem:[#allocation8 + $0x18] sm:$0xff]
    %v453 = vld [vmem:[#allocation8 + $0x20] sm:$0xff]
    %v454 = vld [vmem:[#allocation8 + $0x28] sm:$0xff]
    %v455 = vld [vmem:[#allocation8 + $0x30] sm:$0xff]
    %v456 = vld [vmem:[#allocation8 + $0x38] sm:$0xff]
    %v457 = vld [vmem:[#allocation8 + $0x40] sm:$0xff]
    %v458 = vld [vmem:[#allocation8 + $0x48] sm:$0xff]
    %v459 = vld [vmem:[#allocation8 + $0x50] sm:$0xff]
    %v460 = vld [vmem:[#allocation8 + $0x58] sm:$0xff]
    %v461 = vld [vmem:[#allocation8 + $0x60] sm:$0xff]
    %v462 = vld [vmem:[#allocation8 + $0x68] sm:$0xff]
    %v463 = vld [vmem:[#allocation8 + $0x70] sm:$0xff]
    %v464 = vld [vmem:[#allocation8 + $0x78] sm:$0xff]
    %s465 = scalar_lea.vmem [#allocation6], 32
    %v466 = vld [vmem:[%s465] sm:$0xff]
    %467 = vmatprep.subr.mxu0 0.0
    %468 = vmatpush1.msra.mxu0 %v464
    %469 = vmatprep.subr.mxu0 0.0
    %470 = vmatpush1.msra.mxu0 %v463
    %471 = vmatprep.subr.mxu0 0.0
    %472 = vmatpush1.msra.mxu0 %v462
    %473 = vmatprep.subr.mxu0 0.0
    %474 = vmatpush1.msra.mxu0 %v461
    %475 = vmatprep.subr.mxu0 0.0
    %476 = vmatpush1.msra.mxu0 %v460
    %477 = vmatprep.subr.mxu0 0.0
    %478 = vmatpush1.msra.mxu0 %v459
    %479 = vmatprep.subr.mxu0 0.0
    %480 = vmatpush1.msra.mxu0 %v458
    %481 = vmatprep.subr.mxu0 0.0
    %482 = vmatpush1.msra.mxu0 %v457
    %483 = vmatprep.subr.mxu0 0.0
    %484 = vmatpush1.msra.mxu0 %v456
    %485 = vmatprep.subr.mxu0 0.0
    %486 = vmatpush1.msra.mxu0 %v455
    %487 = vmatprep.subr.mxu0 0.0
    %488 = vmatpush1.msra.mxu0 %v454
    %489 = vmatprep.subr.mxu0 0.0
    %490 = vmatpush1.msra.mxu0 %v453
    %491 = vmatprep.subr.mxu0 0.0
    %492 = vmatpush1.msra.mxu0 %v452
    %493 = vmatprep.subr.mxu0 0.0
    %494 = vmatpush1.msra.mxu0 %v451
    %495 = vmatprep.subr.mxu0 0.0
    %496 = vmatpush1.msra.mxu0 %v450
    %497 = vmatprep.subr.mxu0 0.0
    %498 = vmatpush1.msra.mxu0 %v449
    %499 = vmatprep.subr.mxu0 0.0
    %500 = vmatpush2.msra.mxu0 0.0
    %501 = vmatprep.subr.mxu0 0.0
    %502 = vmatpush2.msra.mxu0 0.0
    %503 = vmatprep.subr.mxu0 0.0
    %504 = vmatpush2.msra.mxu0 0.0
    %505 = vmatprep.subr.mxu0 0.0
    %506 = vmatpush2.msra.mxu0 0.0
    %507 = vmatprep.subr.mxu0 0.0
    %508 = vmatpush2.msra.mxu0 0.0
    %509 = vmatprep.subr.mxu0 0.0
    %510 = vmatpush2.msra.mxu0 0.0
    %511 = vmatprep.subr.mxu0 0.0
    %512 = vmatpush2.msra.mxu0 0.0
    %513 = vmatprep.subr.mxu0 0.0
    %514 = vmatpush2.msra.mxu0 0.0
    %515 = vmatprep.subr.mxu0 0.0
    %516 = vmatpush2.msra.mxu0 0.0
    %517 = vmatprep.subr.mxu0 0.0
    %518 = vmatpush2.msra.mxu0 0.0
    %519 = vmatprep.subr.mxu0 0.0
    %520 = vmatpush2.msra.mxu0 0.0
    %521 = vmatprep.subr.mxu0 0.0
    %522 = vmatpush2.msra.mxu0 0.0
    %523 = vmatprep.subr.mxu0 0.0
    %524 = vmatpush2.msra.mxu0 0.0
    %525 = vmatprep.subr.mxu0 0.0
    %526 = vmatpush2.msra.mxu0 0.0
    %527 = vmatprep.subr.mxu0 0.0
    %528 = vmatpush2.msra.mxu0 0.0
    %529 = vmatprep.subr.mxu0 0.0
    %530 = vmatpush2.msra.mxu0 0.0
    %531 = vmatprep.mubr.f32.mxu0 0.0
    %532 = vmatmul.mubr.f32.gmra.mxu0 %v448
    %v533 = vpop.f32.mrf.mxu0
    %v534 = vadd.f32 %v466, %v533
    %v535 = vpop.f32.mrf.mxu0
    %536 = vdwg.mxu0
    %v537 = vmul.f32 %v445, 0.8
    %v538 = vmul.f32 %v534, 0.2
    %v539 = vadd.f32 %v537, %v538
    %540 = vst [vmem:[#allocation2] sm:$0xff] %v539
    %v541 = vld [vmem:[#allocation2] sm:$0xff]
    %s542 = scalar_lea.vmem [#allocation9], 40
    %543 = vst [vmem:[%s542] sm:$0xff] %v541
    %v544 = vtanh.pop %v541
    %v545 = vld [vmem:[#allocation8] sm:$0xff]
    %v546 = vld [vmem:[#allocation8 + $0x8] sm:$0xff]
    %v547 = vld [vmem:[#allocation8 + $0x10] sm:$0xff]
    %v548 = vld [vmem:[#allocation8 + $0x18] sm:$0xff]
    %v549 = vld [vmem:[#allocation8 + $0x20] sm:$0xff]
    %v550 = vld [vmem:[#allocation8 + $0x28] sm:$0xff]
    %v551 = vld [vmem:[#allocation8 + $0x30] sm:$0xff]
    %v552 = vld [vmem:[#allocation8 + $0x38] sm:$0xff]
    %v553 = vld [vmem:[#allocation8 + $0x40] sm:$0xff]
    %v554 = vld [vmem:[#allocation8 + $0x48] sm:$0xff]
    %v555 = vld [vmem:[#allocation8 + $0x50] sm:$0xff]
    %v556 = vld [vmem:[#allocation8 + $0x58] sm:$0xff]
    %v557 = vld [vmem:[#allocation8 + $0x60] sm:$0xff]
    %v558 = vld [vmem:[#allocation8 + $0x68] sm:$0xff]
    %v559 = vld [vmem:[#allocation8 + $0x70] sm:$0xff]
    %v560 = vld [vmem:[#allocation8 + $0x78] sm:$0xff]
    %s561 = scalar_lea.vmem [#allocation6], 40
    %v562 = vld [vmem:[%s561] sm:$0xff]
    %563 = vmatprep.subr.mxu0 0.0
    %564 = vmatpush1.msra.mxu0 %v560
    %565 = vmatprep.subr.mxu0 0.0
    %566 = vmatpush1.msra.mxu0 %v559
    %567 = vmatprep.subr.mxu0 0.0
    %568 = vmatpush1.msra.mxu0 %v558
    %569 = vmatprep.subr.mxu0 0.0
    %570 = vmatpush1.msra.mxu0 %v557
    %571 = vmatprep.subr.mxu0 0.0
    %572 = vmatpush1.msra.mxu0 %v556
    %573 = vmatprep.subr.mxu0 0.0
    %574 = vmatpush1.msra.mxu0 %v555
    %575 = vmatprep.subr.mxu0 0.0
    %576 = vmatpush1.msra.mxu0 %v554
    %577 = vmatprep.subr.mxu0 0.0
    %578 = vmatpush1.msra.mxu0 %v553
    %579 = vmatprep.subr.mxu0 0.0
    %580 = vmatpush1.msra.mxu0 %v552
    %581 = vmatprep.subr.mxu0 0.0
    %582 = vmatpush1.msra.mxu0 %v551
    %583 = vmatprep.subr.mxu0 0.0
    %584 = vmatpush1.msra.mxu0 %v550
    %585 = vmatprep.subr.mxu0 0.0
    %586 = vmatpush1.msra.mxu0 %v549
    %587 = vmatprep.subr.mxu0 0.0
    %588 = vmatpush1.msra.mxu0 %v548
    %589 = vmatprep.subr.mxu0 0.0
    %590 = vmatpush1.msra.mxu0 %v547
    %591 = vmatprep.subr.mxu0 0.0
    %592 = vmatpush1.msra.mxu0 %v546
    %593 = vmatprep.subr.mxu0 0.0
    %594 = vmatpush1.msra.mxu0 %v545
    %595 = vmatprep.subr.mxu0 0.0
    %596 = vmatpush2.msra.mxu0 0.0
    %597 = vmatprep.subr.mxu0 0.0
    %598 = vmatpush2.msra.mxu0 0.0
    %599 = vmatprep.subr.mxu0 0.0
    %600 = vmatpush2.msra.mxu0 0.0
    %601 = vmatprep.subr.mxu0 0.0
    %602 = vmatpush2.msra.mxu0 0.0
    %603 = vmatprep.subr.mxu0 0.0
    %604 = vmatpush2.msra.mxu0 0.0
    %605 = vmatprep.subr.mxu0 0.0
    %606 = vmatpush2.msra.mxu0 0.0
    %607 = vmatprep.subr.mxu0 0.0
    %608 = vmatpush2.msra.mxu0 0.0
    %609 = vmatprep.subr.mxu0 0.0
    %610 = vmatpush2.msra.mxu0 0.0
    %611 = vmatprep.subr.mxu0 0.0
    %612 = vmatpush2.msra.mxu0 0.0
    %613 = vmatprep.subr.mxu0 0.0
    %614 = vmatpush2.msra.mxu0 0.0
    %615 = vmatprep.subr.mxu0 0.0
    %616 = vmatpush2.msra.mxu0 0.0
    %617 = vmatprep.subr.mxu0 0.0
    %618 = vmatpush2.msra.mxu0 0.0
    %619 = vmatprep.subr.mxu0 0.0
    %620 = vmatpush2.msra.mxu0 0.0
    %621 = vmatprep.subr.mxu0 0.0
    %622 = vmatpush2.msra.mxu0 0.0
    %623 = vmatprep.subr.mxu0 0.0
    %624 = vmatpush2.msra.mxu0 0.0
    %625 = vmatprep.subr.mxu0 0.0
    %626 = vmatpush2.msra.mxu0 0.0
    %627 = vmatprep.mubr.f32.mxu0 0.0
    %628 = vmatmul.mubr.f32.gmra.mxu0 %v544
    %v629 = vpop.f32.mrf.mxu0
    %v630 = vadd.f32 %v562, %v629
    %v631 = vpop.f32.mrf.mxu0
    %632 = vdwg.mxu0
    %v633 = vmul.f32 %v541, 0.8
    %v634 = vmul.f32 %v630, 0.2
    %v635 = vadd.f32 %v633, %v634
    %636 = vst [vmem:[#allocation2] sm:$0xff] %v635
    %v637 = vld [vmem:[#allocation2] sm:$0xff]
    %s638 = scalar_lea.vmem [#allocation9], 48
    %639 = vst [vmem:[%s638] sm:$0xff] %v637
    %v640 = vtanh.pop %v637
    %v641 = vld [vmem:[#allocation8] sm:$0xff]
    %v642 = vld [vmem:[#allocation8 + $0x8] sm:$0xff]
    %v643 = vld [vmem:[#allocation8 + $0x10] sm:$0xff]
    %v644 = vld [vmem:[#allocation8 + $0x18] sm:$0xff]
    %v645 = vld [vmem:[#allocation8 + $0x20] sm:$0xff]
    %v646 = vld [vmem:[#allocation8 + $0x28] sm:$0xff]
    %v647 = vld [vmem:[#allocation8 + $0x30] sm:$0xff]
    %v648 = vld [vmem:[#allocation8 + $0x38] sm:$0xff]
    %v649 = vld [vmem:[#allocation8 + $0x40] sm:$0xff]
    %v650 = vld [vmem:[#allocation8 + $0x48] sm:$0xff]
    %v651 = vld [vmem:[#allocation8 + $0x50] sm:$0xff]
    %v652 = vld [vmem:[#allocation8 + $0x58] sm:$0xff]
    %v653 = vld [vmem:[#allocation8 + $0x60] sm:$0xff]
    %v654 = vld [vmem:[#allocation8 + $0x68] sm:$0xff]
    %v655 = vld [vmem:[#allocation8 + $0x70] sm:$0xff]
    %v656 = vld [vmem:[#allocation8 + $0x78] sm:$0xff]
    %s657 = scalar_lea.vmem [#allocation6], 48
    %v658 = vld [vmem:[%s657] sm:$0xff]
    %659 = vmatprep.subr.mxu0 0.0
    %660 = vmatpush1.msra.mxu0 %v656
    %661 = vmatprep.subr.mxu0 0.0
    %662 = vmatpush1.msra.mxu0 %v655
    %663 = vmatprep.subr.mxu0 0.0
    %664 = vmatpush1.msra.mxu0 %v654
    %665 = vmatprep.subr.mxu0 0.0
    %666 = vmatpush1.msra.mxu0 %v653
    %667 = vmatprep.subr.mxu0 0.0
    %668 = vmatpush1.msra.mxu0 %v652
    %669 = vmatprep.subr.mxu0 0.0
    %670 = vmatpush1.msra.mxu0 %v651
    %671 = vmatprep.subr.mxu0 0.0
    %672 = vmatpush1.msra.mxu0 %v650
    %673 = vmatprep.subr.mxu0 0.0
    %674 = vmatpush1.msra.mxu0 %v649
    %675 = vmatprep.subr.mxu0 0.0
    %676 = vmatpush1.msra.mxu0 %v648
    %677 = vmatprep.subr.mxu0 0.0
    %678 = vmatpush1.msra.mxu0 %v647
    %679 = vmatprep.subr.mxu0 0.0
    %680 = vmatpush1.msra.mxu0 %v646
    %681 = vmatprep.subr.mxu0 0.0
    %682 = vmatpush1.msra.mxu0 %v645
    %683 = vmatprep.subr.mxu0 0.0
    %684 = vmatpush1.msra.mxu0 %v644
    %685 = vmatprep.subr.mxu0 0.0
    %686 = vmatpush1.msra.mxu0 %v643
    %687 = vmatprep.subr.mxu0 0.0
    %688 = vmatpush1.msra.mxu0 %v642
    %689 = vmatprep.subr.mxu0 0.0
    %690 = vmatpush1.msra.mxu0 %v641
    %691 = vmatprep.subr.mxu0 0.0
    %692 = vmatpush2.msra.mxu0 0.0
    %693 = vmatprep.subr.mxu0 0.0
    %694 = vmatpush2.msra.mxu0 0.0
    %695 = vmatprep.subr.mxu0 0.0
    %696 = vmatpush2.msra.mxu0 0.0
    %697 = vmatprep.subr.mxu0 0.0
    %698 = vmatpush2.msra.mxu0 0.0
    %699 = vmatprep.subr.mxu0 0.0
    %700 = vmatpush2.msra.mxu0 0.0
    %701 = vmatprep.subr.mxu0 0.0
    %702 = vmatpush2.msra.mxu0 0.0
    %703 = vmatprep.subr.mxu0 0.0
    %704 = vmatpush2.msra.mxu0 0.0
    %705 = vmatprep.subr.mxu0 0.0
    %706 = vmatpush2.msra.mxu0 0.0
    %707 = vmatprep.subr.mxu0 0.0
    %708 = vmatpush2.msra.mxu0 0.0
    %709 = vmatprep.subr.mxu0 0.0
    %710 = vmatpush2.msra.mxu0 0.0
    %711 = vmatprep.subr.mxu0 0.0
    %712 = vmatpush2.msra.mxu0 0.0
    %713 = vmatprep.subr.mxu0 0.0
    %714 = vmatpush2.msra.mxu0 0.0
    %715 = vmatprep.subr.mxu0 0.0
    %716 = vmatpush2.msra.mxu0 0.0
    %717 = vmatprep.subr.mxu0 0.0
    %718 = vmatpush2.msra.mxu0 0.0
    %719 = vmatprep.subr.mxu0 0.0
    %720 = vmatpush2.msra.mxu0 0.0
    %721 = vmatprep.subr.mxu0 0.0
    %722 = vmatpush2.msra.mxu0 0.0
    %723 = vmatprep.mubr.f32.mxu0 0.0
    %724 = vmatmul.mubr.f32.gmra.mxu0 %v640
    %v725 = vpop.f32.mrf.mxu0
    %v726 = vadd.f32 %v658, %v725
    %v727 = vpop.f32.mrf.mxu0
    %728 = vdwg.mxu0
    %v729 = vmul.f32 %v637, 0.8
    %v730 = vmul.f32 %v726, 0.2
    %v731 = vadd.f32 %v729, %v730
    %732 = vst [vmem:[#allocation2] sm:$0xff] %v731
    %v733 = vld [vmem:[#allocation2] sm:$0xff]
    %s734 = scalar_lea.vmem [#allocation9], 56
    %735 = vst [vmem:[%s734] sm:$0xff] %v733
    %v736 = vtanh.pop %v733
    %v737 = vld [vmem:[#allocation8] sm:$0xff]
    %v738 = vld [vmem:[#allocation8 + $0x8] sm:$0xff]
    %v739 = vld [vmem:[#allocation8 + $0x10] sm:$0xff]
    %v740 = vld [vmem:[#allocation8 + $0x18] sm:$0xff]
    %v741 = vld [vmem:[#allocation8 + $0x20] sm:$0xff]
    %v742 = vld [vmem:[#allocation8 + $0x28] sm:$0xff]
    %v743 = vld [vmem:[#allocation8 + $0x30] sm:$0xff]
    %v744 = vld [vmem:[#allocation8 + $0x38] sm:$0xff]
    %v745 = vld [vmem:[#allocation8 + $0x40] sm:$0xff]
    %v746 = vld [vmem:[#allocation8 + $0x48] sm:$0xff]
    %v747 = vld [vmem:[#allocation8 + $0x50] sm:$0xff]
    %v748 = vld [vmem:[#allocation8 + $0x58] sm:$0xff]
    %v749 = vld [vmem:[#allocation8 + $0x60] sm:$0xff]
    %v750 = vld [vmem:[#allocation8 + $0x68] sm:$0xff]
    %v751 = vld [vmem:[#allocation8 + $0x70] sm:$0xff]
    %v752 = vld [vmem:[#allocation8 + $0x78] sm:$0xff]
    %s753 = scalar_lea.vmem [#allocation6], 56
    %v754 = vld [vmem:[%s753] sm:$0xff]
    %755 = vmatprep.subr.mxu0 0.0
    %756 = vmatpush1.msra.mxu0 %v752
    %757 = vmatprep.subr.mxu0 0.0
    %758 = vmatpush1.msra.mxu0 %v751
    %759 = vmatprep.subr.mxu0 0.0
    %760 = vmatpush1.msra.mxu0 %v750
    %761 = vmatprep.subr.mxu0 0.0
    %762 = vmatpush1.msra.mxu0 %v749
    %763 = vmatprep.subr.mxu0 0.0
    %764 = vmatpush1.msra.mxu0 %v748
    %765 = vmatprep.subr.mxu0 0.0
    %766 = vmatpush1.msra.mxu0 %v747
    %767 = vmatprep.subr.mxu0 0.0
    %768 = vmatpush1.msra.mxu0 %v746
    %769 = vmatprep.subr.mxu0 0.0
    %770 = vmatpush1.msra.mxu0 %v745
    %771 = vmatprep.subr.mxu0 0.0
    %772 = vmatpush1.msra.mxu0 %v744
    %773 = vmatprep.subr.mxu0 0.0
    %774 = vmatpush1.msra.mxu0 %v743
    %775 = vmatprep.subr.mxu0 0.0
    %776 = vmatpush1.msra.mxu0 %v742
    %777 = vmatprep.subr.mxu0 0.0
    %778 = vmatpush1.msra.mxu0 %v741
    %779 = vmatprep.subr.mxu0 0.0
    %780 = vmatpush1.msra.mxu0 %v740
    %781 = vmatprep.subr.mxu0 0.0
    %782 = vmatpush1.msra.mxu0 %v739
    %783 = vmatprep.subr.mxu0 0.0
    %784 = vmatpush1.msra.mxu0 %v738
    %785 = vmatprep.subr.mxu0 0.0
    %786 = vmatpush1.msra.mxu0 %v737
    %787 = vmatprep.subr.mxu0 0.0
    %788 = vmatpush2.msra.mxu0 0.0
    %789 = vmatprep.subr.mxu0 0.0
    %790 = vmatpush2.msra.mxu0 0.0
    %791 = vmatprep.subr.mxu0 0.0
    %792 = vmatpush2.msra.mxu0 0.0
    %793 = vmatprep.subr.mxu0 0.0
    %794 = vmatpush2.msra.mxu0 0.0
    %795 = vmatprep.subr.mxu0 0.0
    %796 = vmatpush2.msra.mxu0 0.0
    %797 = vmatprep.subr.mxu0 0.0
    %798 = vmatpush2.msra.mxu0 0.0
    %799 = vmatprep.subr.mxu0 0.0
    %800 = vmatpush2.msra.mxu0 0.0
    %801 = vmatprep.subr.mxu0 0.0
    %802 = vmatpush2.msra.mxu0 0.0
    %803 = vmatprep.subr.mxu0 0.0
    %804 = vmatpush2.msra.mxu0 0.0
    %805 = vmatprep.subr.mxu0 0.0
    %806 = vmatpush2.msra.mxu0 0.0
    %807 = vmatprep.subr.mxu0 0.0
    %808 = vmatpush2.msra.mxu0 0.0
    %809 = vmatprep.subr.mxu0 0.0
    %810 = vmatpush2.msra.mxu0 0.0
    %811 = vmatprep.subr.mxu0 0.0
    %812 = vmatpush2.msra.mxu0 0.0
    %813 = vmatprep.subr.mxu0 0.0
    %814 = vmatpush2.msra.mxu0 0.0
    %815 = vmatprep.subr.mxu0 0.0
    %816 = vmatpush2.msra.mxu0 0.0
    %817 = vmatprep.subr.mxu0 0.0
    %818 = vmatpush2.msra.mxu0 0.0
    %819 = vmatprep.mubr.f32.mxu0 0.0
    %820 = vmatmul.mubr.f32.gmra.mxu0 %v736
    %v821 = vpop.f32.mrf.mxu0
    %v822 = vadd.f32 %v754, %v821
    %v823 = vpop.f32.mrf.mxu0
    %824 = vdwg.mxu0
    %v825 = vmul.f32 %v733, 0.8
    %v826 = vmul.f32 %v822, 0.2
    %v827 = vadd.f32 %v825, %v826
    %828 = vst [vmem:[#allocation2] sm:$0xff] %v827
    // Predicated region
    $region30: #{tpu_custom_call.1} parent=1 // pred_check
      %p829 = pneg %p57
    $region31: #{tpu_custom_call.1} parent=1 // pred_check_branch
      %831 = sbr.rel (%p829) target = $region33
    $region32: #{tpu_custom_call.1} parent=1 // pred_region
      %v832 = vld [vmem:[#allocation2] sm:$0xff]
      %833 = vst [vmem:[#allocation10] sm:$0xff] %v832
    $region33: #{tpu_custom_call.1} parent=1 // pred_fallthru
      _
    // Predicated region
    $region34: #{tpu_custom_call.1} parent=1 // pred_check
      _
    $region35: #{tpu_custom_call.1} parent=1 // pred_check_branch
      %835 = sbr.rel (0) target = $region37
    $region36: #{tpu_custom_call.1} parent=1 // pred_region
      %s837 = ssub.s32 1024, 1024
      %838 = vsyncadd [#allocation5], %s837
      %s839 = sshll.u32 [#allocation9], 4
      %s840 = int_to_ptr.vmem [resolvable:$true] %s839
      %845 = dma.vmem_to_hbm [thread:$0]  %s840, 1024, %s3, [#allocation5], 128, 128, 8
    $region37: #{tpu_custom_call.1} parent=1 // pred_fallthru
      _
    // Predicated region
    $region38: #{tpu_custom_call.1} parent=1 // pred_check
      _
    $region39: #{tpu_custom_call.1} parent=1 // pred_check_branch
      %847 = sbr.rel (0) target = $region41
    $region40: #{tpu_custom_call.1} parent=1 // pred_region
      %s849 = ssub.s32 128, 128
      %850 = vsyncadd [#allocation11], %s849
      %s852 = sshll.u32 [#allocation10], 4
      %s853 = int_to_ptr.vmem [resolvable:$true] %s852
      %855 = dma.vmem_to_hbm [thread:$0]  %s853, 128, %s4, [#allocation11]
    $region41: #{tpu_custom_call.1} parent=1 // pred_fallthru
      _
    // Predicated region
    $region42: #{tpu_custom_call.1} parent=1 // pred_check
      _
    $region43: #{tpu_custom_call.1} parent=1 // pred_check_branch
      %857 = sbr.rel (0) target = $region45
    $region44: #{tpu_custom_call.1} parent=1 // pred_region
      %858 = dma.done [#allocation5], 1024
    $region45: #{tpu_custom_call.1} parent=1 // pred_fallthru
      _
    // Predicated region
    $region46: #{tpu_custom_call.1} parent=1 // pred_check
      _
    $region47: #{tpu_custom_call.1} parent=1 // pred_check_branch
      %860 = sbr.rel (0) target = $region49
    $region48: #{tpu_custom_call.1} parent=1 // pred_region
      %861 = dma.done [#allocation11], 128
    $region49: #{tpu_custom_call.1} parent=1 // pred_fallthru
      _
    %862 = vsyncpa [#allocation4], 1
    %863 = vsyncpa [#allocation7], 1
    %864 = vsyncpa [#allocation5], 1
    %865 = vsyncpa [#allocation11], 1

</llo_original>
